<compile_context>
chip_gen: v6e
topology: v6e:2x2x1
jax: 0.10.0
libtpu: 0.0.40
codegen_flags: <defaults>
</compile_context>

<pallas_src>
import functools

import jax
import jax.numpy as jnp
from jax import lax
from jax.experimental import pallas as pl
from jax.experimental.pallas import tpu as pltpu

_LANE = 128
_SUBLANE = 8
# Conservative double-buffered pipeline budget: fits v7x's 64 MiB VMEM with
# headroom and is large enough to sit near the HBM roofline on v5e/v6e too.
_PIPELINE_BUDGET = 40 * 1024 * 1024
_VMEM_LIMIT_CAP = 56 * 1024 * 1024


def _cdiv(a, b):
    return -(-a // b)


def _vmem_limit(needed_bytes):
    return int(min(_VMEM_LIMIT_CAP, max(needed_bytes + (8 << 20), 32 << 20)))


# ----------------------------- single-pass path -----------------------------

def _graphnorm_kernel(x_ref, p_ref, o_ref, *, inv_n, eps):
    # x tile: (N, TILE_D); p tile: (3, TILE_D) = [weight; bias; mean_scale].
    x = x_ref[...].astype(jnp.float32)
    p = p_ref[...].astype(jnp.float32)
    w, b, ms = p[0:1, :], p[1:2, :], p[2:3, :]

    mean = jnp.sum(x, axis=0, keepdims=True) * inv_n          # (1, TILE_D)
    mu_ms = mean * ms
    sub = x - mu_ms                                            # VMEM-resident
    var = jnp.sum(sub * sub, axis=0, keepdims=True) * inv_n    # stable centered form
    inv_std = lax.rsqrt(var + eps)                             # EUP slot, ~free
    scale = w * inv_std                                        # fold weight into scale
    o_ref[...] = (sub * scale + b).astype(o_ref.dtype)


def _graph_norm_single_pass(tensor, params, *, inv_n, eps, tile_d):
    n, d = tensor.shape
    grid_d = _cdiv(d, tile_d)
    itm = tensor.dtype.itemsize
    needed = 2 * n * tile_d * (itm + itm) + 2 * 3 * tile_d * params.dtype.itemsize

    kernel = functools.partial(_graphnorm_kernel, inv_n=inv_n, eps=eps)
    x_spec = pl.BlockSpec((n, tile_d), lambda j: (0, j))
    p_spec = pl.BlockSpec((3, tile_d), lambda j: (0, j))
    return pl.pallas_call(
        kernel,
        out_shape=jax.ShapeDtypeStruct((n, d), tensor.dtype),
        grid=(grid_d,),
        in_specs=[x_spec, p_spec],
        out_specs=x_spec,
        compiler_params=pltpu.CompilerParams(
            dimension_semantics=("parallel",),
            vmem_limit_bytes=_vmem_limit(needed),
        ),
    )(tensor, params)


# ------------------------- two-pass (large-N) path ---------------------------

def _stats_kernel(x_ref, s_ref, *, n_valid, tile_n):
    k = pl.program_id(1)

    @pl.when(k == 0)
    def _():
        s_ref[...] = jnp.zeros_like(s_ref)

    x = x_ref[...].astype(jnp.float32)                         # (TILE_N, TILE_D)
    row = k * tile_n + lax.broadcasted_iota(jnp.int32, x.shape, 0)
    x = jnp.where(row < n_valid, x, 0.0)                       # mask partial N chunk
    s_ref[0:1, :] += jnp.sum(x, axis=0, keepdims=True)
    s_ref[1:2, :] += jnp.sum(x * x, axis=0, keepdims=True)


def _apply_kernel(x_ref, ss_ref, o_ref):
    x = x_ref[...].astype(jnp.float32)
    scale = ss_ref[0:1, :]
    shift = ss_ref[1:2, :]
    o_ref[...] = (x * scale + shift).astype(o_ref.dtype)


def _graph_norm_two_pass(tensor, weight, bias, mean_scale, *, inv_n, eps):
    n, d = tensor.shape
    itm = tensor.dtype.itemsize
    d_blocks = _cdiv(d, _LANE)
    tile_d = min(d_blocks, 4) * _LANE                          # up to 512 lanes
    max_tile_n = max(_SUBLANE, _PIPELINE_BUDGET // (2 * tile_d * (itm + itm)))
    tile_n = max(_SUBLANE, (min(max_tile_n, n) // _SUBLANE) * _SUBLANE)
    grid_d = _cdiv(d, tile_d)
    grid_n = _cdiv(n, tile_n)

    x_spec = pl.BlockSpec((tile_n, tile_d), lambda j, k: (k, j))
    s_spec = pl.BlockSpec((2, tile_d), lambda j, k: (0, j))

    # Pass 1: per-feature sum and sum-of-squares, accumulated over N chunks.
    stats_needed = 2 * tile_n * tile_d * itm + 2 * 2 * tile_d * 4
    stats = pl.pallas_call(
        functools.partial(_stats_kernel, n_valid=n, tile_n=tile_n),
        out_shape=jax.ShapeDtypeStruct((2, d), jnp.float32),
        grid=(grid_d, grid_n),
        in_specs=[x_spec],
        out_specs=s_spec,
        compiler_params=pltpu.CompilerParams(
            dimension_semantics=("parallel", "arbitrary"),
            vmem_limit_bytes=_vmem_limit(stats_needed),
        ),
    )(tensor)

    # Tiny per-feature math on (d,)-sized arrays stays in plain XLA.
    w = weight.astype(jnp.float32)
    b = bias.astype(jnp.float32)
    ms = mean_scale.astype(jnp.float32)
    mean = stats[0] * inv_n
    mu_ms = mean * ms
    # TODO(synk): the E[x^2] expansion can lose precision when |mean| >> std; a
    # third streaming pass over x would give the fully centered variance.
    var = jnp.maximum(stats[1] * inv_n - (2.0 * mu_ms) * mean + mu_ms * mu_ms, 0.0)
    inv_std = lax.rsqrt(var + eps)
    scale = w * inv_std
    shift = b - scale * mu_ms
    ss = jnp.stack([scale, shift], axis=0)                     # (2, d) f32

    # Pass 2: streaming apply, out = x * scale + shift.
    apply_needed = 2 * tile_n * tile_d * (itm + itm) + 2 * 2 * tile_d * 4
    return pl.pallas_call(
        _apply_kernel,
        out_shape=jax.ShapeDtypeStruct((n, d), tensor.dtype),
        grid=(grid_d, grid_n),
        in_specs=[x_spec, s_spec],
        out_specs=x_spec,
        compiler_params=pltpu.CompilerParams(
            dimension_semantics=("parallel", "parallel"),
            vmem_limit_bytes=_vmem_limit(apply_needed),
        ),
    )(tensor, ss)


# --------------------------------- wrapper -----------------------------------

def graph_norm_gn(tensor, weight, bias, mean_scale, eps=1e-6, *,
                  force_two_pass=False):
    """GraphNorm 'gn' forward for a single graph; tensor shape (N, D)."""
    n, d = tensor.shape
    inv_n = 1.0 / n
    itm = tensor.dtype.itemsize

    d_blocks = _cdiv(d, _LANE)
    # Widest D-tile (in 128-lane units) whose double-buffered in+out tiles with
    # the full N extent resident still fit the pipeline budget.
    max_tile_blocks = _PIPELINE_BUDGET // (2 * n * _LANE * (itm + itm))

    if force_two_pass or max_tile_blocks < 1:
        # Full-N column tile would not fit VMEM -> two-pass (3 HBM passes).
        return _graph_norm_two_pass(tensor, weight, bias, mean_scale,
                                    inv_n=inv_n, eps=eps)

    tile_blocks = min(d_blocks, int(max_tile_blocks))
    if tile_blocks == d_blocks and d_blocks >= 2:
        # Keep >= 2 grid steps so both v7x TensorCores get work.
        tile_blocks = _cdiv(d_blocks, 2)
    tile_d = tile_blocks * _LANE

    params = jnp.stack([weight, bias, mean_scale], axis=0).astype(jnp.float32)
    return _graph_norm_single_pass(tensor, params, inv_n=inv_n, eps=eps,
                                   tile_d=tile_d)


def graph_norm_ref(tensor, weight, bias, mean_scale, eps=1e-6):
    n = tensor.shape[0]
    mean = jnp.sum(tensor, axis=0, keepdims=True) / n
    sub = tensor - mean * mean_scale
    var = jnp.sum(sub * sub, axis=0, keepdims=True) / n
    std = jnp.sqrt(var + eps)
    return weight * sub / std + bias


if __name__ == "__main__":
    key = jax.random.PRNGKey(0)

    num_nodes = 8
    hidden_dim = 32

    # Node features (the "tensor" argument to forward).
    x = jax.random.normal(key, (num_nodes, hidden_dim), dtype=jnp.float32)

    # Parameters exactly as in GraphNorm.__init__ for norm_type == 'gn'.
    weight = jnp.ones((hidden_dim,), dtype=jnp.float32)
    bias = jnp.zeros((hidden_dim,), dtype=jnp.float32)
    mean_scale = jnp.ones((hidden_dim,), dtype=jnp.float32)

    out = graph_norm_gn(x, weight, bias, mean_scale)
    out = jax.block_until_ready(out)
    ref = graph_norm_ref(x, weight, bias, mean_scale)
    assert out.shape == (num_nodes, hidden_dim)
    assert jnp.allclose(out, ref, atol=1e-5, rtol=1e-5)

    # Exercise the large-N two-pass fallback (forced) on a modest shape,
    # including non-128-multiple D and a partial N chunk.
    x2 = jax.random.normal(jax.random.PRNGKey(1), (300, 200), jnp.float32) * 2.0 + 0.5
    w2 = jax.random.normal(jax.random.PRNGKey(2), (200,), jnp.float32)
    b2 = jax.random.normal(jax.random.PRNGKey(3), (200,), jnp.float32)
    m2 = jax.random.normal(jax.random.PRNGKey(4), (200,), jnp.float32)
    out2 = jax.block_until_ready(
        graph_norm_gn(x2, w2, b2, m2, force_two_pass=True))
    ref2 = graph_norm_ref(x2, w2, b2, m2)
    assert out2.shape == (300, 200)
    assert jnp.allclose(out2, ref2, atol=1e-3, rtol=1e-3)

    print("KERNEL_OK")
</pallas_src>

<mosaic_0001>
module attributes {stable_mosaic.version = 11 : i64} {
  func.func @_graphnorm_kernel(%arg0: i32, %arg1: memref<8x128xf32, #tpu.memory_space<vmem>>, %arg2: memref<3x128xf32, #tpu.memory_space<vmem>>, %arg3: memref<8x128xf32, #tpu.memory_space<vmem>>) attributes {dimension_semantics = [#tpu.dimension_semantics<parallel>], iteration_bounds = array<i64: 1>, scalar_prefetch = 0 : i64, scratch_operands = 0 : i64, tpu.core_type = #tpu.core_type<tc>, window_params = [{transform_indices = @transform_0, window_bounds = array<i64: 8, 128>}, {transform_indices = @transform_1, window_bounds = array<i64: 3, 128>}, {transform_indices = @transform_2, window_bounds = array<i64: 8, 128>}]} {
    %c0 = arith.constant 0 : index
    %c0_0 = arith.constant 0 : index
    %0 = vector.load %arg1[%c0, %c0_0] : memref<8x128xf32, #tpu.memory_space<vmem>>, vector<8x128xf32>
    %c0_1 = arith.constant 0 : index
    %c0_2 = arith.constant 0 : index
    %1 = vector.load %arg2[%c0_1, %c0_2] : memref<3x128xf32, #tpu.memory_space<vmem>>, vector<3x128xf32>
    %2 = vector.extract_strided_slice %1 {offsets = [0, 0], sizes = [1, 128], strides = [1, 1]} : vector<3x128xf32> to vector<1x128xf32>
    %3 = vector.extract_strided_slice %1 {offsets = [1, 0], sizes = [1, 128], strides = [1, 1]} : vector<3x128xf32> to vector<1x128xf32>
    %4 = vector.extract_strided_slice %1 {offsets = [2, 0], sizes = [1, 128], strides = [1, 1]} : vector<3x128xf32> to vector<1x128xf32>
    %cst = arith.constant dense<0.000000e+00> : vector<128xf32>
    %5 = vector.multi_reduction <add>, %0, %cst [0] : vector<8x128xf32> to vector<128xf32>
    %6 = vector.shape_cast %5 : vector<128xf32> to vector<1x128xf32>
    %cst_3 = arith.constant 1.250000e-01 : f32
    %7 = vector.broadcast %cst_3 : f32 to vector<1x128xf32>
    %8 = arith.mulf %6, %7 : vector<1x128xf32>
    %9 = arith.mulf %8, %4 : vector<1x128xf32>
    %10 = vector.broadcast %9 : vector<1x128xf32> to vector<8x128xf32>
    %11 = arith.subf %0, %10 : vector<8x128xf32>
    %12 = arith.mulf %11, %11 : vector<8x128xf32>
    %cst_4 = arith.constant dense<0.000000e+00> : vector<128xf32>
    %13 = vector.multi_reduction <add>, %12, %cst_4 [0] : vector<8x128xf32> to vector<128xf32>
    %14 = vector.shape_cast %13 : vector<128xf32> to vector<1x128xf32>
    %cst_5 = arith.constant 1.250000e-01 : f32
    %15 = vector.broadcast %cst_5 : f32 to vector<1x128xf32>
    %16 = arith.mulf %14, %15 : vector<1x128xf32>
    %cst_6 = arith.constant 9.99999997E-7 : f32
    %17 = vector.broadcast %cst_6 : f32 to vector<1x128xf32>
    %18 = arith.addf %16, %17 : vector<1x128xf32>
    %19 = math.rsqrt %18 : vector<1x128xf32>
    %20 = arith.mulf %2, %19 : vector<1x128xf32>
    %21 = vector.broadcast %20 : vector<1x128xf32> to vector<8x128xf32>
    %22 = arith.mulf %11, %21 : vector<8x128xf32>
    %23 = vector.broadcast %3 : vector<1x128xf32> to vector<8x128xf32>
    %24 = arith.addf %22, %23 : vector<8x128xf32>
    %c0_7 = arith.constant 0 : index
    %c0_8 = arith.constant 0 : index
    %25 = vector.load %arg3[%c0_7, %c0_8] : memref<8x128xf32, #tpu.memory_space<vmem>>, vector<8x128xf32>
    tpu.vector_store %arg3[%c0_7, %c0_8], %24 {strides = array<i32>} : memref<8x128xf32, #tpu.memory_space<vmem>>, vector<8x128xf32>,
    return
  }
  func.func @transform_0(%arg0: i32) -> (i32, i32) {
    %c0_i32 = arith.constant 0 : i32
    %c0_i32_0 = arith.constant 0 : i32
    return %c0_i32, %arg0 : i32, i32
  }
  func.func @transform_1(%arg0: i32) -> (i32, i32) {
    %c0_i32 = arith.constant 0 : i32
    %c0_i32_0 = arith.constant 0 : i32
    return %c0_i32, %arg0 : i32, i32
  }
  func.func @transform_2(%arg0: i32) -> (i32, i32) {
    %c0_i32 = arith.constant 0 : i32
    %c0_i32_0 = arith.constant 0 : i32
    return %c0_i32, %arg0 : i32, i32
  }
}

</mosaic_0001>

<llo_original>
// kernel: tpu_custom_call.1
$region0: #{tpu_custom_call.1}
  #allocation0 [shape = 'u32[]', space=smem, size = 0x4, offset = 0x4, fixed_abs, tag = 'smem constant byte address 0x4 - core index']
  #allocation1 [shape = 'u32[144,128]{1,0:T(1,128)}', space=vmem, size = 0x12000, scoped, tag = 'internal scratch']
  %s0 = inlined_call_operand.hbm [shape: f32[8,32], index: 0, kind: input, shape index: {}]
  %s1 = inlined_call_operand.hbm [shape: f32[3,32], index: 1, kind: input, shape index: {}]
  %s2 = inlined_call_operand.hbm [shape: f32[8,32], index: 2, kind: output, shape index: {}]
  %s3 = sld [smem:[#allocation0]]
  $region26: #{tpu_custom_call.1} parent=0
    _
  %s5 = ssub.s32 1, %s3
  %s6 = scalar_select 0, %s5, %s3
  $region1: #{tpu_custom_call.1} parent=0
    #allocation2 [shape = 'u8[4096]{0}', space=vmem, size = 0x1000, scoped, tag = 'input window, operand 0, single buffered']
    #allocation3 [shape = 's32[1]{0}', space=sflag, size = 0x4, scoped, tag = 'scoped memory for tpu_custom_call.1']
    #allocation4 [shape = 's32[1]{0}', space=sflag, size = 0x4, scoped, tag = 'scoped memory for tpu_custom_call.1']
    #allocation5 [shape = 'u8[2048]{0}', space=vmem, size = 0x800, scoped, tag = 'input window, operand 1, single buffered']
    #allocation6 [shape = 's32[1]{0}', space=sflag, size = 0x4, scoped, tag = 'scoped memory for tpu_custom_call.1']
    #allocation7 [shape = 'u8[4096]{0}', space=vmem, size = 0x1000, scoped, tag = 'output window, operand 0, single buffered']
    %7 = vsyncpa [#allocation3], 0
    %8 = vsyncpa [#allocation6], 0
    %9 = vsyncpa [#allocation4], 0
    // Predicated region
    $region2: #{tpu_custom_call.1} parent=1 // pred_check
      _
    $region3: #{tpu_custom_call.1} parent=1 // pred_check_branch
      %11 = sbr.rel (0) target = $region5
    $region4: #{tpu_custom_call.1} parent=1 // pred_region
      %s13 = ssub.s32 128, 128
      %14 = vsyncadd [#allocation3], %s13
      %s16 = sshll.u32 [#allocation2], 4
      %s17 = int_to_ptr.vmem [resolvable:$true] %s16
      %19 = dma.hbm_to_vmem [thread:$0]  %s0, 128, %s17, [#allocation3]
    $region5: #{tpu_custom_call.1} parent=1 // pred_fallthru
      _
    // Predicated region
    $region6: #{tpu_custom_call.1} parent=1 // pred_check
      _
    $region7: #{tpu_custom_call.1} parent=1 // pred_check_branch
      %21 = sbr.rel (0) target = $region9
    $region8: #{tpu_custom_call.1} parent=1 // pred_region
      %s23 = ssub.s32 64, 64
      %24 = vsyncadd [#allocation6], %s23
      %s26 = sshll.u32 [#allocation5], 4
      %s27 = int_to_ptr.vmem [resolvable:$true] %s26
      %29 = dma.hbm_to_vmem [thread:$0]  %s1, 64, %s27, [#allocation6]
    $region9: #{tpu_custom_call.1} parent=1 // pred_fallthru
      _
    // Predicated region
    $region10: #{tpu_custom_call.1} parent=1 // pred_check
      _
    $region11: #{tpu_custom_call.1} parent=1 // pred_check_branch
      %31 = sbr.rel (0) target = $region13
    $region12: #{tpu_custom_call.1} parent=1 // pred_region
      %32 = dma.done [#allocation3], 128
    $region13: #{tpu_custom_call.1} parent=1 // pred_fallthru
      _
    // Predicated region
    $region14: #{tpu_custom_call.1} parent=1 // pred_check
      _
    $region15: #{tpu_custom_call.1} parent=1 // pred_check_branch
      %34 = sbr.rel (0) target = $region17
    $region16: #{tpu_custom_call.1} parent=1 // pred_region
      %35 = dma.done [#allocation6], 64
    $region17: #{tpu_custom_call.1} parent=1 // pred_fallthru
      _
    %v36 = vld [vmem:[#allocation2] sm:$0xff]
    %v37 = vld [vmem:[#allocation5] sm:$0x7]
    %v38 = vrot.slane %v36, 4
    %v39 = vadd.f32 %v36, %v38
    %v40 = vrot.slane %v39, 2
    %v41 = vadd.f32 %v39, %v40
    %v42 = vrot.slane %v41, 1
    %v43 = vadd.f32 %v41, %v42
    %v44 = vmul.f32 %v43, 0.125
    %v45 = vmul.f32 %v44, %v37
    %v46 = vlaneseq
    %v47 = vshrl.u32 %v46, 7
    %v48 = vsub.s32 2, %v47
    %v49 = vrot.slane %v45, %v48
    %v50 = vsub.f32 %v36, %v49
    %v51 = vmul.f32 %v50, %v50
    %v52 = vrot.slane %v51, 4
    %v53 = vadd.f32 %v51, %v52
    %v54 = vrot.slane %v53, 2
    %v55 = vadd.f32 %v53, %v54
    %v56 = vrot.slane %v55, 1
    %v57 = vadd.f32 %v55, %v56
    %v58 = vmul.f32 %v57, 0.125
    %v59 = vadd.f32 %v58, 1e-06
    %v60 = vrsqrt.pop %v59
    %v61 = vmul.f32 %v37, %v60
    %v62 = vlaneseq
    %v63 = vshrl.u32 %v62, 7
    %v64 = vsub.s32 0, %v63
    %v65 = vrot.slane %v61, %v64
    %v66 = vmul.f32 %v50, %v65
    %v67 = vlaneseq
    %v68 = vshrl.u32 %v67, 7
    %v69 = vsub.s32 1, %v68
    %v70 = vrot.slane %v37, %v69
    %v71 = vadd.f32 %v66, %v70
    %72 = vst [vmem:[#allocation7] sm:$0xff] %v71
    // Predicated region
    $region18: #{tpu_custom_call.1} parent=1 // pred_check
      _
    $region19: #{tpu_custom_call.1} parent=1 // pred_check_branch
      %74 = sbr.rel (0) target = $region21
    $region20: #{tpu_custom_call.1} parent=1 // pred_region
      %s76 = ssub.s32 128, 128
      %77 = vsyncadd [#allocation4], %s76
      %s79 = sshll.u32 [#allocation7], 4
      %s80 = int_to_ptr.vmem [resolvable:$true] %s79
      %82 = dma.vmem_to_hbm [thread:$0]  %s80, 128, %s2, [#allocation4]
    $region21: #{tpu_custom_call.1} parent=1 // pred_fallthru
      _
    // Predicated region
    $region22: #{tpu_custom_call.1} parent=1 // pred_check
      _
    $region23: #{tpu_custom_call.1} parent=1 // pred_check_branch
      %84 = sbr.rel (0) target = $region25
    $region24: #{tpu_custom_call.1} parent=1 // pred_region
      %85 = dma.done [#allocation4], 128
    $region25: #{tpu_custom_call.1} parent=1 // pred_fallthru
      _
    %86 = vsyncpa [#allocation3], 1
    %87 = vsyncpa [#allocation6], 1
    %88 = vsyncpa [#allocation4], 1

</llo_original>
